<compile_context>
chip_gen: v5e
topology: v5e:2x2
jax: 0.10.0
libtpu: 0.0.40
codegen_flags: <defaults>
</compile_context>

<pallas_src>
import jax
import jax.numpy as jnp
from jax.experimental import pallas as pl
from jax.experimental.pallas import tpu as pltpu


def _avg_pool_mask_kernel(t_ref, m_ref, inv_ref, o_ref):
    # t_ref:   [Bt, Lt, Ht]  tensor block, native dtype (f32 / bf16)
    # m_ref:   [Bt, Lt, 1 ]  mask block in its original dtype (cast in-kernel)
    # inv_ref: [Bt, 1]       f32 precomputed 1 / sum_l mask[b, l]
    # o_ref:   [Bt, Ht]      f32 output block; doubles as the accumulator across L
    l_idx = pl.program_id(2)

    @pl.when(l_idx == 0)
    def _init():
        o_ref[...] = jnp.zeros_like(o_ref)

    t = t_ref[...].astype(jnp.float32)           # f32 accumulation regardless of input dtype
    m = m_ref[...].astype(jnp.float32)           # (Bt, Lt, 1) -> lane-broadcast along H
    # VPU masked multiply + sublane-axis (L) reduction; no MXU involvement.
    o_ref[...] += jnp.sum(t * m, axis=1)

    @pl.when(l_idx == pl.num_programs(2) - 1)
    def _finalize():
        o_ref[...] *= inv_ref[...]               # (Bt,1) broadcast over (Bt,Ht)


def _vmem_capacity_bytes() -> int:
    """Physical VMEM of the current TPU generation; conservative fallback if unknown."""
    try:
        info = pltpu.get_tpu_info()
        cap = getattr(info, "vmem_capacity_bytes", None)
        if cap:
            return int(cap)
    except Exception:
        pass
    return 64 * 1024 * 1024  # v7x per-TensorCore value (most conservative)


def _choose_tiles(B, L, H, elem_bytes, budget_bytes):
    """Pick (Bt, Lt, Ht) filling the per-buffer byte budget while respecting layout rules."""
    # H: lane axis of tensor/output blocks -> multiple of 128 or full H.
    Ht = next((c for c in (1024, 512, 256, 128) if H % c == 0), H)
    # L: sublane axis of tensor/mask blocks -> multiple of 8 or full L.
    lt_cands = [c for c in (4096, 2048, 1024, 512, 256, 128, 64, 32, 16, 8) if L % c == 0]
    if not lt_cands:
        lt_cands = [L]
    # B: leading dim of the tensor block, but sublane axis of output/inv blocks
    #    -> multiple of 8 or full B.
    bt_cands = [c for c in (64, 32, 16, 8) if B % c == 0]
    if not bt_cands:
        bt_cands = [B]

    best = None  # (tile_bytes, Bt, Lt)
    for bt in bt_cands:
        for lt in lt_cands:
            tile = bt * lt * Ht * elem_bytes
            if tile <= budget_bytes and (best is None or tile > best[0]):
                best = (tile, bt, lt)
    if best is None:
        # Even the smallest candidate exceeds the budget (huge non-divisible dims).
        # TODO(synk): pad L/H to tileable multiples upstream for pathological shapes.
        Bt, Lt = min(bt_cands), min(lt_cands)
    else:
        _, Bt, Lt = best
    return Bt, Lt, Ht


def avg_pool_with_mask(tensor: jax.Array, mask: jax.Array, *,
                       tile_budget_bytes: int | None = None) -> jax.Array:
    """tensor: [B, L, H] float (f32/bf16); mask: [B, L] 0/1 -> [B, H] float32."""
    B, L, H = tensor.shape
    elem_bytes = jnp.dtype(tensor.dtype).itemsize

    cap = _vmem_capacity_bytes()
    # ~16 MiB/buffer on 128 MiB parts (v5e/v6e), ~8 MiB/buffer on v7x (64 MiB).
    budget = tile_budget_bytes if tile_budget_bytes is not None else min(16 * 1024 * 1024, cap // 8)
    vmem_limit = int(min(96 * 1024 * 1024, (cap * 3) // 4))

    Bt, Lt, Ht = _choose_tiles(B, L, H, elem_bytes, budget)
    grid = (B // Bt, H // Ht, L // Lt)

    # Tiny wrapper-side preprocessing (hoisted out of the kernel's inner loop):
    #   mask in L-sublane-aligned [B, L, 1] layout; inverse mask count as [B, 1] f32.
    mask3 = mask.reshape(B, L, 1)
    inv_cnt = 1.0 / jnp.sum(mask.astype(jnp.float32), axis=1, keepdims=True)  # [B, 1]

    # TODO(synk): on v7x, if VMEM caps the tensor tile well below ~8 MiB, a
    # pipeline_mode=pl.Buffered(3) on the tensor BlockSpec hides DMA issue latency.
    out = pl.pallas_call(
        _avg_pool_mask_kernel,
        out_shape=jax.ShapeDtypeStruct((B, H), jnp.float32),
        grid_spec=pltpu.PrefetchScalarGridSpec(
            num_scalar_prefetch=0,
            grid=grid,
            in_specs=[
                pl.BlockSpec((Bt, Lt, Ht), lambda b, h, l: (b, l, h)),  # tensor
                pl.BlockSpec((Bt, Lt, 1), lambda b, h, l: (b, l, 0)),   # mask
                pl.BlockSpec((Bt, 1), lambda b, h, l: (b, 0)),          # 1/count
            ],
            out_specs=pl.BlockSpec((Bt, Ht), lambda b, h, l: (b, h)),
        ),
        compiler_params=pltpu.CompilerParams(
            dimension_semantics=("parallel", "parallel", "arbitrary"),
            vmem_limit_bytes=vmem_limit,
        ),
    )(tensor, mask3, inv_cnt)
    return out


def _reference(tensor, mask):
    m = mask.astype(jnp.float32)[:, :, None]
    return jnp.sum(tensor.astype(jnp.float32) * m, axis=1) / jnp.sum(m, axis=1)


if __name__ == "__main__":
    key = jax.random.PRNGKey(0)
    k1, k2, k3, k4, k5, k6 = jax.random.split(key, 6)

    # Small shape from the module spec: batch=2, seq=8, hidden=32.
    B, L, H = 2, 8, 32
    tensor = jax.random.normal(k1, (B, L, H), dtype=jnp.float32)
    mask = (jax.random.uniform(k2, (B, L)) > 0.3).astype(jnp.int32)
    mask = mask.at[:, 0].set(1)   # at least one valid position per row

    out = avg_pool_with_mask(tensor, mask)
    jax.block_until_ready(out)

    ref = _reference(tensor, mask)
    assert out.shape == (B, H)
    assert jnp.allclose(out, ref, atol=1e-5, rtol=1e-5)

    # Second check: force a small tile budget so the L-reduction accumulator is
    # exercised across multiple grid steps (init / accumulate / finalize paths).
    B2, L2, H2 = 2, 512, 128
    tensor2 = jax.random.normal(k3, (B2, L2, H2), dtype=jnp.float32)
    mask2 = (jax.random.uniform(k4, (B2, L2)) > 0.3).astype(jnp.int32)
    mask2 = mask2.at[:, 0].set(1)

    out2 = avg_pool_with_mask(tensor2, mask2, tile_budget_bytes=300_000)  # -> Lt=256, 2 L-steps
    jax.block_until_ready(out2)
    ref2 = _reference(tensor2, mask2)
    assert out2.shape == (B2, H2)
    assert jnp.allclose(out2, ref2, atol=1e-4, rtol=1e-4)

    # Third check: bf16 input stays in its native dtype through the DMA, f32 accumulation.
    B3, L3, H3 = 2, 256, 256
    tensor3 = jax.random.normal(k5, (B3, L3, H3), dtype=jnp.bfloat16)
    mask3_ = (jax.random.uniform(k6, (B3, L3)) > 0.3).astype(jnp.int32)
    mask3_ = mask3_.at[:, 0].set(1)

    out3 = avg_pool_with_mask(tensor3, mask3_)
    jax.block_until_ready(out3)
    ref3 = _reference(tensor3, mask3_)
    assert out3.shape == (B3, H3)
    assert jnp.allclose(out3, ref3, atol=1e-3, rtol=1e-3)

    print("KERNEL_OK")
</pallas_src>

<mosaic_0001>
module attributes {stable_mosaic.version = 11 : i64} {
  func.func @_avg_pool_mask_kernel(%arg0: i32, %arg1: i32, %arg2: i32, %arg3: memref<2x8x32xf32, #tpu.memory_space<vmem>>, %arg4: memref<2x8x1xi32, #tpu.memory_space<vmem>>, %arg5: memref<2x1xf32, #tpu.memory_space<vmem>>, %arg6: memref<2x32xf32, #tpu.memory_space<vmem>>) attributes {dimension_semantics = [#tpu.dimension_semantics<parallel>, #tpu.dimension_semantics<parallel>, #tpu.dimension_semantics<arbitrary>], iteration_bounds = array<i64: 1, 1, 1>, scalar_prefetch = 0 : i64, scratch_operands = 0 : i64, tpu.core_type = #tpu.core_type<tc>, window_params = [{transform_indices = @transform_0, window_bounds = array<i64: 2, 8, 32>}, {transform_indices = @transform_1, window_bounds = array<i64: 2, 8, 1>}, {transform_indices = @transform_2, window_bounds = array<i64: 2, 1>}, {transform_indices = @transform_3, window_bounds = array<i64: 2, 32>}]} {
    %c0_i32 = arith.constant 0 : i32
    %0 = arith.cmpi eq, %arg2, %c0_i32 : i32
    %1 = arith.extui %0 : i1 to i32
    %c0_i32_0 = arith.constant 0 : i32
    %2 = arith.cmpi ne, %1, %c0_i32_0 : i32
    scf.if %2 {
      %cst_12 = arith.constant 0.000000e+00 : f32
      %15 = vector.broadcast %cst_12 : f32 to vector<2x32xf32>
      %c0_13 = arith.constant 0 : index
      %c0_14 = arith.constant 0 : index
      %16 = vector.load %arg6[%c0_13, %c0_14] : memref<2x32xf32, #tpu.memory_space<vmem>>, vector<2x32xf32>
      tpu.vector_store %arg6[%c0_13, %c0_14], %15 {strides = array<i32>} : memref<2x32xf32, #tpu.memory_space<vmem>>, vector<2x32xf32>,
    } else {
    }
    %c0 = arith.constant 0 : index
    %c0_1 = arith.constant 0 : index
    %c0_2 = arith.constant 0 : index
    %3 = vector.load %arg3[%c0, %c0_1, %c0_2] : memref<2x8x32xf32, #tpu.memory_space<vmem>>, vector<2x8x32xf32>
    %c0_3 = arith.constant 0 : index
    %c0_4 = arith.constant 0 : index
    %c0_5 = arith.constant 0 : index
    %4 = vector.load %arg4[%c0_3, %c0_4, %c0_5] : memref<2x8x1xi32, #tpu.memory_space<vmem>>, vector<2x8x1xi32>
    %5 = arith.sitofp %4 : vector<2x8x1xi32> to vector<2x8x1xf32>
    %c0_6 = arith.constant 0 : index
    %c0_7 = arith.constant 0 : index
    %6 = vector.load %arg6[%c0_6, %c0_7] : memref<2x32xf32, #tpu.memory_space<vmem>>, vector<2x32xf32>
    %7 = vector.broadcast %5 : vector<2x8x1xf32> to vector<2x8x32xf32>
    %8 = arith.mulf %3, %7 : vector<2x8x32xf32>
    %cst = arith.constant dense<0.000000e+00> : vector<2x32xf32>
    %9 = vector.multi_reduction <add>, %8, %cst [1] : vector<2x8x32xf32> to vector<2x32xf32>
    %10 = arith.addf %6, %9 : vector<2x32xf32>
    %c0_8 = arith.constant 0 : index
    %c0_9 = arith.constant 0 : index
    %11 = vector.load %arg6[%c0_8, %c0_9] : memref<2x32xf32, #tpu.memory_space<vmem>>, vector<2x32xf32>
    tpu.vector_store %arg6[%c0_8, %c0_9], %10 {strides = array<i32>} : memref<2x32xf32, #tpu.memory_space<vmem>>, vector<2x32xf32>,
    %c0_i32_10 = arith.constant 0 : i32
    %12 = arith.cmpi eq, %arg2, %c0_i32_10 : i32
    %13 = arith.extui %12 : i1 to i32
    %c0_i32_11 = arith.constant 0 : i32
    %14 = arith.cmpi ne, %13, %c0_i32_11 : i32
    scf.if %14 {
      %c0_12 = arith.constant 0 : index
      %c0_13 = arith.constant 0 : index
      %15 = vector.load %arg6[%c0_12, %c0_13] : memref<2x32xf32, #tpu.memory_space<vmem>>, vector<2x32xf32>
      %c0_14 = arith.constant 0 : index
      %c0_15 = arith.constant 0 : index
      %16 = vector.load %arg5[%c0_14, %c0_15] : memref<2x1xf32, #tpu.memory_space<vmem>>, vector<2x1xf32>
      %17 = vector.broadcast %16 : vector<2x1xf32> to vector<2x32xf32>
      %18 = arith.mulf %15, %17 : vector<2x32xf32>
      %c0_16 = arith.constant 0 : index
      %c0_17 = arith.constant 0 : index
      %19 = vector.load %arg6[%c0_16, %c0_17] : memref<2x32xf32, #tpu.memory_space<vmem>>, vector<2x32xf32>
      tpu.vector_store %arg6[%c0_16, %c0_17], %18 {strides = array<i32>} : memref<2x32xf32, #tpu.memory_space<vmem>>, vector<2x32xf32>,
    } else {
    }
    return
  }
  func.func @transform_0(%arg0: i32, %arg1: i32, %arg2: i32) -> (i32, i32, i32) {
    %c0_i32 = arith.constant 0 : i32
    return %arg0, %arg2, %arg1 : i32, i32, i32
  }
  func.func @transform_1(%arg0: i32, %arg1: i32, %arg2: i32) -> (i32, i32, i32) {
    %c0_i32 = arith.constant 0 : i32
    %c0_i32_0 = arith.constant 0 : i32
    return %arg0, %arg2, %c0_i32 : i32, i32, i32
  }
  func.func @transform_2(%arg0: i32, %arg1: i32, %arg2: i32) -> (i32, i32) {
    %c0_i32 = arith.constant 0 : i32
    %c0_i32_0 = arith.constant 0 : i32
    return %arg0, %c0_i32 : i32, i32
  }
  func.func @transform_3(%arg0: i32, %arg1: i32, %arg2: i32) -> (i32, i32) {
    %c0_i32 = arith.constant 0 : i32
    return %arg0, %arg1 : i32, i32
  }
}

</mosaic_0001>

<llo_original>
// kernel: tpu_custom_call.1
$region0: #{tpu_custom_call.1}
  #allocation0 [shape = 'u32[]', space=smem, size = 0x4, offset = 0x4, fixed_abs, tag = 'smem constant byte address 0x4 - core index']
  #allocation1 [shape = 'u32[72,128]{1,0:T(1,128)}', space=vmem, size = 0x9000, scoped, tag = 'internal scratch']
  %s0 = inlined_call_operand.vmem [shape: f32[2,8,32], index: 0, kind: input, shape index: {}]
  %s1 = inlined_call_operand.vmem [shape: s32[2,8,1], index: 1, kind: input, shape index: {}]
  %s2 = inlined_call_operand.vmem [shape: f32[2,1], index: 2, kind: input, shape index: {}]
  %s3 = inlined_call_operand.hbm [shape: f32[2,32], index: 3, kind: output, shape index: {}]
  %s4 = sld [smem:[#allocation0]]
  $region30: #{tpu_custom_call.1} parent=0
    _
  %s6 = ssub.s32 1, %s4
  %s7 = scalar_select 0, %s6, %s4
  $region1: #{tpu_custom_call.1} parent=0
    #allocation2 [shape = 'u8[1024]{0}', space=vmem, size = 0x400, scoped, tag = 'output window, operand 0, single buffered']
    #allocation3 [shape = 's32[1]{0}', space=sflag, size = 0x4, scoped, tag = 'scoped memory for tpu_custom_call.1']
    %8 = vsyncpa [#allocation3], 0
    // Predicated region
    $region2: #{tpu_custom_call.1} parent=1 // pred_check
      _
    $region3: #{tpu_custom_call.1} parent=1 // pred_check_branch
      %10 = sbr.rel (0) target = $region5
    $region4: #{tpu_custom_call.1} parent=1 // pred_region
      _
    $region5: #{tpu_custom_call.1} parent=1 // pred_fallthru
      _
    // Predicated region
    $region6: #{tpu_custom_call.1} parent=1 // pred_check
      _
    $region7: #{tpu_custom_call.1} parent=1 // pred_check_branch
      %12 = sbr.rel (0) target = $region9
    $region8: #{tpu_custom_call.1} parent=1 // pred_region
      _
    $region9: #{tpu_custom_call.1} parent=1 // pred_fallthru
      _
    // Predicated region
    $region10: #{tpu_custom_call.1} parent=1 // pred_check
      _
    $region11: #{tpu_custom_call.1} parent=1 // pred_check_branch
      %14 = sbr.rel (0) target = $region13
    $region12: #{tpu_custom_call.1} parent=1 // pred_region
      _
    $region13: #{tpu_custom_call.1} parent=1 // pred_fallthru
      _
    %p15 = scmp.eq.s32.totalorder 0, 0
    // Predicated region
    $region14: #{tpu_custom_call.1} parent=1 // pred_check
      %p16 = pneg %p15
    $region15: #{tpu_custom_call.1} parent=1 // pred_check_branch
      %18 = sbr.rel (%p16) target = $region17
    $region16: #{tpu_custom_call.1} parent=1 // pred_region
      %vm19 = vcmask 254976
      %20 = vst.msk [vmem:[#allocation2] sm:$0x3] %vm19, 0.0
    $region17: #{tpu_custom_call.1} parent=1 // pred_fallthru
      _
    %v21 = vld [vmem:[%s0] sm:$0xff]
    %v22 = vld [vmem:[%s0 + $0x8] sm:$0xff]
    %v23 = vld [vmem:[%s1] sm:$0xff]
    %v24 = vld [vmem:[%s1 + $0x8] sm:$0xff]
    %v25 = vcvt.s32.f32 %v23
    %v26 = vcvt.s32.f32 %v24
    %v27 = vld [vmem:[#allocation2] sm:$0x3]
    %29 = vset.pattern.permute.xlu0 0
    %30 = vperm.xlu0 %29, %v25
    %v31 = vpop.permute.xlu0 %30
    %34 = vset.pattern.permute.xlu0 0
    %35 = vperm.xlu0 %34, %v26
    %v36 = vpop.permute.xlu0 %35
    %v38 = vmul.f32 %v21, %v31
    %v39 = vmul.f32 %v22, %v36
    %vm40 = vcmask 261120
    %v41 = vsel %vm40, %v38, 0.0
    %v42 = vrot.slane %v41, 4
    %v43 = vadd.f32 %v41, %v42
    %v44 = vrot.slane %v43, 2
    %v45 = vadd.f32 %v43, %v44
    %v46 = vrot.slane %v45, 1
    %v47 = vadd.f32 %v45, %v46
    %v48 = vsel %vm40, %v39, 0.0
    %v49 = vrot.slane %v48, 4
    %v50 = vadd.f32 %v48, %v49
    %v51 = vrot.slane %v50, 2
    %v52 = vadd.f32 %v50, %v51
    %v53 = vrot.slane %v52, 1
    %v54 = vadd.f32 %v52, %v53
    %vm57 = vcmask 1041409
    %v58 = vsel %vm57, %v54, %v47
    %v60 = vadd.f32 %v27, %v58
    %vm61 = vcmask 254976
    %62 = vst.msk [vmem:[#allocation2] sm:$0x3] %vm61, %v60
    // Predicated region
    $region18: #{tpu_custom_call.1} parent=1 // pred_check
      %p63 = pneg %p15
    $region19: #{tpu_custom_call.1} parent=1 // pred_check_branch
      %65 = sbr.rel (%p63) target = $region21
    $region20: #{tpu_custom_call.1} parent=1 // pred_region
      %v66 = vld [vmem:[#allocation2] sm:$0x3]
      %v67 = vld [vmem:[%s2] sm:$0x3]
      %69 = vset.pattern.permute.xlu0 0
      %70 = vperm.xlu0 %69, %v67
      %v71 = vpop.permute.xlu0 %70
      %v73 = vmul.f32 %v66, %v71
      %74 = vst.msk [vmem:[#allocation2] sm:$0x3] %vm61, %v73
    $region21: #{tpu_custom_call.1} parent=1 // pred_fallthru
      _
    // Predicated region
    $region22: #{tpu_custom_call.1} parent=1 // pred_check
      _
    $region23: #{tpu_custom_call.1} parent=1 // pred_check_branch
      %76 = sbr.rel (0) target = $region25
    $region24: #{tpu_custom_call.1} parent=1 // pred_region
      %78 = vsyncadd [#allocation3], 0
      %s80 = sshll.u32 [#allocation2], 4
      %s81 = int_to_ptr.vmem [resolvable:$true] %s80
      %s82 = sshll.u32 %s3, 4
      %s83 = int_to_ptr.hbm [resolvable:$true] %s82
      %85 = dma.vmem_to_hbm [thread:$0]  %s81, 32, %s83, [#allocation3]
    $region25: #{tpu_custom_call.1} parent=1 // pred_fallthru
      _
    // Predicated region
    $region26: #{tpu_custom_call.1} parent=1 // pred_check
      _
    $region27: #{tpu_custom_call.1} parent=1 // pred_check_branch
      %87 = sbr.rel (0) target = $region29
    $region28: #{tpu_custom_call.1} parent=1 // pred_region
      %89 = dma.done [#allocation3], 32
    $region29: #{tpu_custom_call.1} parent=1 // pred_fallthru
      _
    %90 = vsyncpa [#allocation3], 1

</llo_original>
